<compile_context>
chip_gen: v6e
topology: v6e:2x2x1
jax: 0.10.0
libtpu: 0.0.40
codegen_flags: <defaults>
</compile_context>

<pallas_src>
import functools

import jax
import jax.numpy as jnp
from jax.experimental import pallas as pl
from jax.experimental.pallas import tpu as pltpu

_MIB = 1024 * 1024


@functools.lru_cache(maxsize=None)
def _hardware_policy():
    """Generation-aware tiling policy.

    128 MiB-VMEM parts (v5e/v6e/...): big full-N weight tiles, 1 TensorCore.
    64 MiB-VMEM parts (v7x): smaller budget, force an N split for the 2 TCs.
    Unknown hardware: conservative (previous behaviour).
    """
    vmem = None
    try:
        info = pltpu.get_tpu_info()
        vmem = getattr(info, "vmem_capacity_bytes", None)
    except Exception:
        vmem = None
    if vmem is not None and vmem >= 100 * _MIB:
        return {"tile_budget": 96 * _MIB, "vmem_limit": 110 * _MIB, "num_tc": 1}
    if vmem is not None and vmem >= 56 * _MIB:
        return {"tile_budget": 40 * _MIB, "vmem_limit": 56 * _MIB, "num_tc": 2}
    return {"tile_budget": 32 * _MIB, "vmem_limit": 48 * _MIB, "num_tc": 1}


def _tile_candidates(total, unit):
    """Valid Mosaic tile sizes along an axis (descending): the full extent, or
    divisors of `total` that are multiples of `unit` (8 sublane / 128 lane)."""
    cands = {total}
    d = unit
    while d < total:
        if total % d == 0:
            cands.add(d)
        d += unit
    return sorted(cands, reverse=True)


def _pick_tm(M, tm_cap):
    """Full batch if small, else the largest multiple-of-8 divisor <= tm_cap."""
    if M <= tm_cap:
        return M
    for d in _tile_candidates(M, 8):
        if d <= tm_cap:
            return d
    return M  # pathological (e.g. prime) batch: fall back to the full batch


def _tile_vmem_bytes(tm, tn, tk, *, x_bytes, w_bytes, out_bytes):
    return (2 * tk * tn * w_bytes      # double-buffered weight tile
            + 2 * tm * tk * x_bytes    # double-buffered x tile
            + tm * tn * 4              # f32 accumulator scratch
            + 2 * tm * tn * out_bytes  # double-buffered output tile
            + 2 * tn * 4)              # double-buffered bias tile


def _pick_tk(K, tn, tm, *, x_bytes, w_bytes, out_bytes, budget):
    """Largest K tile whose working set fits the VMEM budget."""
    cands = _tile_candidates(K, 128)
    for tk in cands:                   # descending: first fit = largest
        if _tile_vmem_bytes(tm, tn, tk, x_bytes=x_bytes, w_bytes=w_bytes,
                            out_bytes=out_bytes) <= budget:
            return tk
    return cands[-1]                   # defensive fallback: smallest tile


def _pick_tn(K, N, policy, tm_cap, *, x_bytes=2, w_bytes=2, out_bytes=2):
    """Output-tile width.  On multi-TC parts keep N//tn >= num_tc (so both
    TensorCores stream weights); otherwise prefer the largest (ideally full-N)
    tile that minimizes grid steps."""
    cands = _tile_candidates(N, 128)
    if policy["num_tc"] >= 2:
        split = [t for t in cands if N // t >= policy["num_tc"]]
        if split:
            cands = split
    best_score, best_tn = None, cands[-1]
    for tn in cands:
        tk = _pick_tk(K, tn, tm_cap, x_bytes=x_bytes, w_bytes=w_bytes,
                      out_bytes=out_bytes, budget=policy["tile_budget"])
        steps = (N // tn) * (K // tk)
        score = (steps, -tn, -(tk * tn))
        if best_score is None or score < best_score:
            best_score, best_tn = score, tn
    return best_tn


def _linear_kernel(x_ref, w_ref, b_ref, o_ref, acc_ref, *, apply_relu):
    """One (tm, tn) output tile, accumulated in f32 over the K grid axis."""
    k = pl.program_id(2)

    @pl.when(k == 0)
    def _():
        acc_ref[...] = jnp.zeros_like(acc_ref)

    # bf16 x bf16 MXU matmul with f32 accumulation.
    acc_ref[...] += jnp.dot(x_ref[...], w_ref[...],
                            preferred_element_type=jnp.float32)

    @pl.when(k == pl.num_programs(2) - 1)
    def _():
        out = acc_ref[...] + b_ref[...]   # f32 bias broadcast over rows
        if apply_relu:
            out = jnp.maximum(out, 0.0)
        o_ref[...] = out.astype(o_ref.dtype)


def pallas_linear(x, w_tiled, b, *, apply_relu=False, out_dtype=jnp.bfloat16,
                  tm_cap=256):
    """out = relu?(x @ W + b) with W pre-tiled as (N//tn, K, tn) bf16.

    The pre-tiled layout keeps every (tk, tn) weight DMA fully contiguous even
    when tn < N (dual-TensorCore split on v7x)."""
    M, K = x.shape
    G, K2, tn = w_tiled.shape
    assert K == K2
    N = G * tn
    assert b.shape == (1, N)

    policy = _hardware_policy()
    x_bytes = x.dtype.itemsize
    w_bytes = w_tiled.dtype.itemsize
    out_bytes = jnp.dtype(out_dtype).itemsize

    tm = _pick_tm(M, tm_cap)
    tk = _pick_tk(K, tn, tm, x_bytes=x_bytes, w_bytes=w_bytes,
                  out_bytes=out_bytes, budget=policy["tile_budget"])
    assert M % tm == 0 and K % tk == 0

    grid = (M // tm, G, K // tk)
    kernel = functools.partial(_linear_kernel, apply_relu=apply_relu)

    cost = pl.CostEstimate(
        flops=2 * M * K * N,
        transcendentals=0,
        bytes_accessed=(M * K * x_bytes + G * K * tn * w_bytes
                        + N * 4 + M * N * out_bytes),
    )

    return pl.pallas_call(
        kernel,
        out_shape=jax.ShapeDtypeStruct((M, N), out_dtype),
        grid_spec=pltpu.PrefetchScalarGridSpec(
            num_scalar_prefetch=0,
            grid=grid,
            in_specs=[
                pl.BlockSpec((tm, tk), lambda i, j, k: (i, k)),            # x tile
                pl.BlockSpec((None, tk, tn), lambda i, j, k: (j, k, 0)),   # contiguous weight tile
                pl.BlockSpec((1, tn), lambda i, j, k: (0, j)),             # bias tile
            ],
            out_specs=pl.BlockSpec((tm, tn), lambda i, j, k: (i, j)),
            scratch_shapes=[pltpu.VMEM((tm, tn), jnp.float32)],
        ),
        compiler_params=pltpu.CompilerParams(
            dimension_semantics=("parallel", "parallel", "arbitrary"),
            vmem_limit_bytes=policy["vmem_limit"],
        ),
        cost_estimate=cost,
    )(x, w_tiled, b)


def init_raw_params(key, d_in, hidden, d_out):
    """PyTorch-style Linear init: W (out, in), b (out,), U(-1/sqrt(fan_in), +)."""
    ks = jax.random.split(key, 6)

    def lin(kw, kb, fan_in, fan_out):
        bound = 1.0 / jnp.sqrt(fan_in)
        w = jax.random.uniform(kw, (fan_out, fan_in), jnp.float32, -bound, bound)
        b = jax.random.uniform(kb, (fan_out,), jnp.float32, -bound, bound)
        return w, b

    return (lin(ks[0], ks[1], d_in, hidden),
            lin(ks[2], ks[3], hidden, hidden),
            lin(ks[4], ks[5], hidden, d_out))


def _prepare_hidden_layer(w, b, policy, tm_cap):
    """Pre-transpose + pre-tile a (N, K) PyTorch weight to (N//tn, K, tn) bf16."""
    N, K = w.shape
    tn = _pick_tn(K, N, policy, tm_cap)
    w_t = jnp.asarray(w, jnp.float32).T.astype(jnp.bfloat16)       # (K, N)
    w_tiled = w_t.reshape(K, N // tn, tn).transpose(1, 0, 2)       # (G, K, tn)
    b2 = jnp.asarray(b, jnp.float32).reshape(1, N)
    return w_tiled, b2


def prepare_params(raw_params, *, tm_cap=256):
    """One-time weight preparation (bf16, pre-transposed, pre-tiled)."""
    policy = _hardware_policy()
    (w1, b1), (w2, b2), (w3, b3) = raw_params
    l1 = _prepare_hidden_layer(w1, b1, policy, tm_cap)
    l2 = _prepare_hidden_layer(w2, b2, policy, tm_cap)
    # Degenerate 4096 -> 2 head: keep it out of the tiled Pallas path (a 2-lane
    # output tile is a masked partial store; the layer is ~0.03 MFLOP).
    w3t = jnp.asarray(w3, jnp.float32).T.astype(jnp.bfloat16)       # (K, 2)
    b3f = jnp.asarray(b3, jnp.float32)
    return (l1, l2, (w3t, b3f))


def classifier_forward(x, params):
    """Eval-mode forward matching the PyTorch Classifier (dropout = identity)."""
    (w1, b1), (w2, b2), (w3t, b3) = params
    x = x.astype(jnp.bfloat16)
    # dropout(relu(hidden1(x))) -> dropout is identity at inference
    # TODO(synk): training-mode dropout would need pltpu.prng_seed / prng_random_bits masking.
    h1 = pallas_linear(x, w1, b1, apply_relu=True)
    # dropout(relu(hidden2(x)))
    h2 = pallas_linear(h1, w2, b2, apply_relu=True)
    # output head (4096 -> 2): plain MXU dot, f32 accumulation / output
    return jnp.dot(h2, w3t, preferred_element_type=jnp.float32) + b3


if __name__ == "__main__":
    # Small shapes consistent with the module's forward (x: [batch, features]).
    # Real model uses D_IN=25088, HIDDEN=4096, OUT=2; scaled down for the test.
    BATCH, D_IN, HIDDEN, D_OUT = 2, 512, 256, 2

    key = jax.random.PRNGKey(0)
    k_x, k_p = jax.random.split(key)
    x = jax.random.normal(k_x, (BATCH, D_IN), jnp.float32)

    raw = init_raw_params(k_p, D_IN, HIDDEN, D_OUT)
    params = prepare_params(raw)

    fwd = jax.jit(classifier_forward)
    out = jax.block_until_ready(fwd(x, params))

    # Pure-JAX reference with the same bf16-weight / bf16-activation numerics
    # (dropout identity in eval mode).
    def ref_linear(h, w_t, b, relu):
        y = jnp.dot(h, w_t, preferred_element_type=jnp.float32) + b
        return jnp.maximum(y, 0.0) if relu else y

    (w1, b1), (w2, b2), (w3, b3) = raw
    w1t = w1.T.astype(jnp.bfloat16)
    w2t = w2.T.astype(jnp.bfloat16)
    w3t = w3.T.astype(jnp.bfloat16)
    r = x.astype(jnp.bfloat16)
    r = ref_linear(r, w1t, b1, True).astype(jnp.bfloat16)
    r = ref_linear(r, w2t, b2, True).astype(jnp.bfloat16)
    ref = ref_linear(r, w3t, b3, False)

    assert out.shape == (BATCH, D_OUT)
    assert out.dtype == jnp.float32
    assert jnp.allclose(out, ref, atol=2e-2, rtol=2e-2), (out, ref)

    print("KERNEL_OK")
</pallas_src>

<mosaic_0001>
module attributes {stable_mosaic.version = 11 : i64} {
  func.func @_linear_kernel(%arg0: i32, %arg1: i32, %arg2: i32, %arg3: memref<2x512xbf16, #tpu.memory_space<vmem>>, %arg4: memref<1x512x256xbf16, #tpu.memory_space<vmem>>, %arg5: memref<1x256xf32, #tpu.memory_space<vmem>>, %arg6: memref<2x256xbf16, #tpu.memory_space<vmem>>, %arg7: memref<2x256xf32, #tpu.memory_space<vmem>>) attributes {dimension_semantics = [#tpu.dimension_semantics<parallel>, #tpu.dimension_semantics<parallel>, #tpu.dimension_semantics<arbitrary>], iteration_bounds = array<i64: 1, 1, 1>, scalar_prefetch = 0 : i64, scratch_operands = 1 : i64, tpu.core_type = #tpu.core_type<tc>, window_params = [{transform_indices = @transform_0, window_bounds = array<i64: 2, 512>}, {transform_indices = @transform_1, window_bounds = array<i64: 1, 512, 256>}, {transform_indices = @transform_2, window_bounds = array<i64: 1, 256>}, {transform_indices = @transform_3, window_bounds = array<i64: 2, 256>}]} {
    %c0_i32 = arith.constant 0 : i32
    %0 = arith.cmpi eq, %arg2, %c0_i32 : i32
    %1 = arith.extui %0 : i1 to i32
    %c0_i32_0 = arith.constant 0 : i32
    %2 = arith.cmpi ne, %1, %c0_i32_0 : i32
    scf.if %2 {
      %cst_11 = arith.constant 0.000000e+00 : f32
      %13 = vector.broadcast %cst_11 : f32 to vector<2x256xf32>
      %c0_12 = arith.constant 0 : index
      %c0_13 = arith.constant 0 : index
      %14 = vector.load %arg7[%c0_12, %c0_13] : memref<2x256xf32, #tpu.memory_space<vmem>>, vector<2x256xf32>
      tpu.vector_store %arg7[%c0_12, %c0_13], %13 {strides = array<i32>} : memref<2x256xf32, #tpu.memory_space<vmem>>, vector<2x256xf32>,
    } else {
    }
    %c0 = arith.constant 0 : index
    %c0_1 = arith.constant 0 : index
    %3 = vector.load %arg7[%c0, %c0_1] : memref<2x256xf32, #tpu.memory_space<vmem>>, vector<2x256xf32>
    %c0_2 = arith.constant 0 : index
    %c0_3 = arith.constant 0 : index
    %4 = vector.load %arg3[%c0_2, %c0_3] : memref<2x512xbf16, #tpu.memory_space<vmem>>, vector<2x512xbf16>
    %c0_4 = arith.constant 0 : index
    %c0_5 = arith.constant 0 : index
    %c0_6 = arith.constant 0 : index
    %5 = vector.load %arg4[%c0_4, %c0_5, %c0_6] : memref<1x512x256xbf16, #tpu.memory_space<vmem>>, vector<1x512x256xbf16>
    %6 = vector.shape_cast %5 : vector<1x512x256xbf16> to vector<512x256xbf16>
    %cst = arith.constant dense<0.000000e+00> : vector<2x256xf32>
    %7 = tpu.matmul %4, %6, %cst {dimension_numbers = #tpu.dot_dimension_numbers<[1], [0], [0], [1], [0, 0, 1, 1], [], []>} : vector<2x512xbf16>, vector<512x256xbf16>, vector<2x256xf32> -> vector<2x256xf32>
    %8 = arith.addf %3, %7 : vector<2x256xf32>
    %c0_7 = arith.constant 0 : index
    %c0_8 = arith.constant 0 : index
    %9 = vector.load %arg7[%c0_7, %c0_8] : memref<2x256xf32, #tpu.memory_space<vmem>>, vector<2x256xf32>
    tpu.vector_store %arg7[%c0_7, %c0_8], %8 {strides = array<i32>} : memref<2x256xf32, #tpu.memory_space<vmem>>, vector<2x256xf32>,
    %c0_i32_9 = arith.constant 0 : i32
    %10 = arith.cmpi eq, %arg2, %c0_i32_9 : i32
    %11 = arith.extui %10 : i1 to i32
    %c0_i32_10 = arith.constant 0 : i32
    %12 = arith.cmpi ne, %11, %c0_i32_10 : i32
    scf.if %12 {
      %c0_11 = arith.constant 0 : index
      %c0_12 = arith.constant 0 : index
      %13 = vector.load %arg7[%c0_11, %c0_12] : memref<2x256xf32, #tpu.memory_space<vmem>>, vector<2x256xf32>
      %c0_13 = arith.constant 0 : index
      %c0_14 = arith.constant 0 : index
      %14 = vector.load %arg5[%c0_13, %c0_14] : memref<1x256xf32, #tpu.memory_space<vmem>>, vector<1x256xf32>
      %15 = vector.broadcast %14 : vector<1x256xf32> to vector<2x256xf32>
      %16 = arith.addf %13, %15 : vector<2x256xf32>
      %cst_15 = arith.constant 0.000000e+00 : f32
      %17 = vector.broadcast %cst_15 : f32 to vector<2x256xf32>
      %18 = arith.maximumf %16, %17 : vector<2x256xf32>
      %19 = arith.truncf %18 : vector<2x256xf32> to vector<2x256xbf16>
      %c0_16 = arith.constant 0 : index
      %c0_17 = arith.constant 0 : index
      %20 = vector.load %arg6[%c0_16, %c0_17] : memref<2x256xbf16, #tpu.memory_space<vmem>>, vector<2x256xbf16>
      tpu.vector_store %arg6[%c0_16, %c0_17], %19 {strides = array<i32>} : memref<2x256xbf16, #tpu.memory_space<vmem>>, vector<2x256xbf16>,
    } else {
    }
    return
  }
  func.func @transform_0(%arg0: i32, %arg1: i32, %arg2: i32) -> (i32, i32) {
    %c0_i32 = arith.constant 0 : i32
    return %arg0, %arg2 : i32, i32
  }
  func.func @transform_1(%arg0: i32, %arg1: i32, %arg2: i32) -> (i32, i32, i32) {
    %c0_i32 = arith.constant 0 : i32
    %c0_i32_0 = arith.constant 0 : i32
    return %arg1, %arg2, %c0_i32 : i32, i32, i32
  }
  func.func @transform_2(%arg0: i32, %arg1: i32, %arg2: i32) -> (i32, i32) {
    %c0_i32 = arith.constant 0 : i32
    %c0_i32_0 = arith.constant 0 : i32
    return %c0_i32, %arg1 : i32, i32
  }
  func.func @transform_3(%arg0: i32, %arg1: i32, %arg2: i32) -> (i32, i32) {
    %c0_i32 = arith.constant 0 : i32
    return %arg0, %arg1 : i32, i32
  }
}

module attributes {stable_mosaic.version = 11 : i64} {
  func.func @_linear_kernel(%arg0: i32, %arg1: i32, %arg2: i32, %arg3: memref<2x256xbf16, #tpu.memory_space<vmem>>, %arg4: memref<1x256x256xbf16, #tpu.memory_space<vmem>>, %arg5: memref<1x256xf32, #tpu.memory_space<vmem>>, %arg6: memref<2x256xbf16, #tpu.memory_space<vmem>>, %arg7: memref<2x256xf32, #tpu.memory_space<vmem>>) attributes {dimension_semantics = [#tpu.dimension_semantics<parallel>, #tpu.dimension_semantics<parallel>, #tpu.dimension_semantics<arbitrary>], iteration_bounds = array<i64: 1, 1, 1>, scalar_prefetch = 0 : i64, scratch_operands = 1 : i64, tpu.core_type = #tpu.core_type<tc>, window_params = [{transform_indices = @transform_0, window_bounds = array<i64: 2, 256>}, {transform_indices = @transform_1, window_bounds = array<i64: 1, 256, 256>}, {transform_indices = @transform_2, window_bounds = array<i64: 1, 256>}, {transform_indices = @transform_3, window_bounds = array<i64: 2, 256>}]} {
    %c0_i32 = arith.constant 0 : i32
    %0 = arith.cmpi eq, %arg2, %c0_i32 : i32
    %1 = arith.extui %0 : i1 to i32
    %c0_i32_0 = arith.constant 0 : i32
    %2 = arith.cmpi ne, %1, %c0_i32_0 : i32
    scf.if %2 {
      %cst_11 = arith.constant 0.000000e+00 : f32
      %13 = vector.broadcast %cst_11 : f32 to vector<2x256xf32>
      %c0_12 = arith.constant 0 : index
      %c0_13 = arith.constant 0 : index
      %14 = vector.load %arg7[%c0_12, %c0_13] : memref<2x256xf32, #tpu.memory_space<vmem>>, vector<2x256xf32>
      tpu.vector_store %arg7[%c0_12, %c0_13], %13 {strides = array<i32>} : memref<2x256xf32, #tpu.memory_space<vmem>>, vector<2x256xf32>,
    } else {
    }
    %c0 = arith.constant 0 : index
    %c0_1 = arith.constant 0 : index
    %3 = vector.load %arg7[%c0, %c0_1] : memref<2x256xf32, #tpu.memory_space<vmem>>, vector<2x256xf32>
    %c0_2 = arith.constant 0 : index
    %c0_3 = arith.constant 0 : index
    %4 = vector.load %arg3[%c0_2, %c0_3] : memref<2x256xbf16, #tpu.memory_space<vmem>>, vector<2x256xbf16>
    %c0_4 = arith.constant 0 : index
    %c0_5 = arith.constant 0 : index
    %c0_6 = arith.constant 0 : index
    %5 = vector.load %arg4[%c0_4, %c0_5, %c0_6] : memref<1x256x256xbf16, #tpu.memory_space<vmem>>, vector<1x256x256xbf16>
    %6 = vector.shape_cast %5 : vector<1x256x256xbf16> to vector<256x256xbf16>
    %cst = arith.constant dense<0.000000e+00> : vector<2x256xf32>
    %7 = tpu.matmul %4, %6, %cst {dimension_numbers = #tpu.dot_dimension_numbers<[1], [0], [0], [1], [0, 0, 1, 1], [], []>} : vector<2x256xbf16>, vector<256x256xbf16>, vector<2x256xf32> -> vector<2x256xf32>
    %8 = arith.addf %3, %7 : vector<2x256xf32>
    %c0_7 = arith.constant 0 : index
    %c0_8 = arith.constant 0 : index
    %9 = vector.load %arg7[%c0_7, %c0_8] : memref<2x256xf32, #tpu.memory_space<vmem>>, vector<2x256xf32>
    tpu.vector_store %arg7[%c0_7, %c0_8], %8 {strides = array<i32>} : memref<2x256xf32, #tpu.memory_space<vmem>>, vector<2x256xf32>,
    %c0_i32_9 = arith.constant 0 : i32
    %10 = arith.cmpi eq, %arg2, %c0_i32_9 : i32
    %11 = arith.extui %10 : i1 to i32
    %c0_i32_10 = arith.constant 0 : i32
    %12 = arith.cmpi ne, %11, %c0_i32_10 : i32
    scf.if %12 {
      %c0_11 = arith.constant 0 : index
      %c0_12 = arith.constant 0 : index
      %13 = vector.load %arg7[%c0_11, %c0_12] : memref<2x256xf32, #tpu.memory_space<vmem>>, vector<2x256xf32>
      %c0_13 = arith.constant 0 : index
      %c0_14 = arith.constant 0 : index
      %14 = vector.load %arg5[%c0_13, %c0_14] : memref<1x256xf32, #tpu.memory_space<vmem>>, vector<1x256xf32>
      %15 = vector.broadcast %14 : vector<1x256xf32> to vector<2x256xf32>
      %16 = arith.addf %13, %15 : vector<2x256xf32>
      %cst_15 = arith.constant 0.000000e+00 : f32
      %17 = vector.broadcast %cst_15 : f32 to vector<2x256xf32>
      %18 = arith.maximumf %16, %17 : vector<2x256xf32>
      %19 = arith.truncf %18 : vector<2x256xf32> to vector<2x256xbf16>
      %c0_16 = arith.constant 0 : index
      %c0_17 = arith.constant 0 : index
      %20 = vector.load %arg6[%c0_16, %c0_17] : memref<2x256xbf16, #tpu.memory_space<vmem>>, vector<2x256xbf16>
      tpu.vector_store %arg6[%c0_16, %c0_17], %19 {strides = array<i32>} : memref<2x256xbf16, #tpu.memory_space<vmem>>, vector<2x256xbf16>,
    } else {
    }
    return
  }
  func.func @transform_0(%arg0: i32, %arg1: i32, %arg2: i32) -> (i32, i32) {
    %c0_i32 = arith.constant 0 : i32
    return %arg0, %arg2 : i32, i32
  }
  func.func @transform_1(%arg0: i32, %arg1: i32, %arg2: i32) -> (i32, i32, i32) {
    %c0_i32 = arith.constant 0 : i32
    %c0_i32_0 = arith.constant 0 : i32
    return %arg1, %arg2, %c0_i32 : i32, i32, i32
  }
  func.func @transform_2(%arg0: i32, %arg1: i32, %arg2: i32) -> (i32, i32) {
    %c0_i32 = arith.constant 0 : i32
    %c0_i32_0 = arith.constant 0 : i32
    return %c0_i32, %arg1 : i32, i32
  }
  func.func @transform_3(%arg0: i32, %arg1: i32, %arg2: i32) -> (i32, i32) {
    %c0_i32 = arith.constant 0 : i32
    return %arg0, %arg1 : i32, i32
  }
}

</mosaic_0001>

<llo_original>
// kernel: classifier_forward.3
$region0: #{classifier_forward.3}
  #allocation0 [shape = 'u32[]', space=smem, size = 0x4, offset = 0x4, fixed_abs, tag = 'smem constant byte address 0x4 - core index']
  #allocation1 [shape = 'u32[144,128]{1,0:T(1,128)}', space=vmem, size = 0x12000, scoped, tag = 'internal scratch']
  #allocation2 [shape = 'f32[2,256]{1,0:T(2,128)}', space=vmem, size = 0x800, scoped, tag = 'scratch operand']
  %s0 = inlined_call_operand.vmem [shape: bf16[2,256], index: 0, kind: input, shape index: {}]
  %s1 = inlined_call_operand.vmem [shape: bf16[1,256,256], index: 1, kind: input, shape index: {}]
  %s2 = inlined_call_operand.vmem [shape: f32[1,256], index: 2, kind: input, shape index: {}]
  %s3 = inlined_call_operand.vmem [shape: bf16[2,256], index: 3, kind: output, shape index: {}]
  %s4 = sld [smem:[#allocation0]]
  $region30: #{classifier_forward.3} parent=0
    _
  %s6 = ssub.s32 1, %s4
  %s7 = scalar_select 0, %s6, %s4
  // Predicated region
  $region2: #{classifier_forward.3} parent=0 // pred_check
    _
  $region3: #{classifier_forward.3} parent=0 // pred_check_branch
    %9 = sbr.rel (0) target = $region5
  $region4: #{classifier_forward.3} parent=0 // pred_region
    _
  $region5: #{classifier_forward.3} parent=0 // pred_fallthru
    _
  // Predicated region
  $region6: #{classifier_forward.3} parent=0 // pred_check
    _
  $region7: #{classifier_forward.3} parent=0 // pred_check_branch
    %11 = sbr.rel (0) target = $region9
  $region8: #{classifier_forward.3} parent=0 // pred_region
    _
  $region9: #{classifier_forward.3} parent=0 // pred_fallthru
    _
  // Predicated region
  $region10: #{classifier_forward.3} parent=0 // pred_check
    _
  $region11: #{classifier_forward.3} parent=0 // pred_check_branch
    %13 = sbr.rel (0) target = $region13
  $region12: #{classifier_forward.3} parent=0 // pred_region
    _
  $region13: #{classifier_forward.3} parent=0 // pred_fallthru
    _
  %p14 = scmp.eq.s32.totalorder 0, 0
  // Predicated region
  $region14: #{classifier_forward.3} parent=0 // pred_check
    %p15 = pneg %p14
  $region15: #{classifier_forward.3} parent=0 // pred_check_branch
    %17 = sbr.rel (%p15) target = $region17
  $region16: #{classifier_forward.3} parent=0 // pred_region
    %18 = vst [vmem:[#allocation2] sm:$0xf] 0.0
  $region17: #{classifier_forward.3} parent=0 // pred_fallthru
    _
  %v19 = vld [vmem:[#allocation2] sm:$0xf]
  %v20 = vld [vmem:[%s0] sm:$0x3]
  %v21 = vld [vmem:[%s1] sm:$0xff]
  %v22 = vld [vmem:[%s1 + $0x8] sm:$0xff]
  %v23 = vld [vmem:[%s1 + $0x10] sm:$0xff]
  %v24 = vld [vmem:[%s1 + $0x18] sm:$0xff]
  %v25 = vld [vmem:[%s1 + $0x20] sm:$0xff]
  %v26 = vld [vmem:[%s1 + $0x28] sm:$0xff]
  %v27 = vld [vmem:[%s1 + $0x30] sm:$0xff]
  %v28 = vld [vmem:[%s1 + $0x38] sm:$0xff]
  %v29 = vld [vmem:[%s1 + $0x40] sm:$0xff]
  %v30 = vld [vmem:[%s1 + $0x48] sm:$0xff]
  %v31 = vld [vmem:[%s1 + $0x50] sm:$0xff]
  %v32 = vld [vmem:[%s1 + $0x58] sm:$0xff]
  %v33 = vld [vmem:[%s1 + $0x60] sm:$0xff]
  %v34 = vld [vmem:[%s1 + $0x68] sm:$0xff]
  %v35 = vld [vmem:[%s1 + $0x70] sm:$0xff]
  %v36 = vld [vmem:[%s1 + $0x78] sm:$0xff]
  %v37 = vld [vmem:[%s1 + $0x80] sm:$0xff]
  %v38 = vld [vmem:[%s1 + $0x88] sm:$0xff]
  %v39 = vld [vmem:[%s1 + $0x90] sm:$0xff]
  %v40 = vld [vmem:[%s1 + $0x98] sm:$0xff]
  %v41 = vld [vmem:[%s1 + $0xa0] sm:$0xff]
  %v42 = vld [vmem:[%s1 + $0xa8] sm:$0xff]
  %v43 = vld [vmem:[%s1 + $0xb0] sm:$0xff]
  %v44 = vld [vmem:[%s1 + $0xb8] sm:$0xff]
  %v45 = vld [vmem:[%s1 + $0xc0] sm:$0xff]
  %v46 = vld [vmem:[%s1 + $0xc8] sm:$0xff]
  %v47 = vld [vmem:[%s1 + $0xd0] sm:$0xff]
  %v48 = vld [vmem:[%s1 + $0xd8] sm:$0xff]
  %v49 = vld [vmem:[%s1 + $0xe0] sm:$0xff]
  %v50 = vld [vmem:[%s1 + $0xe8] sm:$0xff]
  %v51 = vld [vmem:[%s1 + $0xf0] sm:$0xff]
  %v52 = vld [vmem:[%s1 + $0xf8] sm:$0xff]
  %v55 = vunpack.c.l.s4 1966171168
  %v56 = vunpack.c.0.s8 %v55
  %v57 = vlaneseq
  %v58 = vshrl.u32 %v57, 7
  %v59 = vsub.s32 %v56, %v58
  %v60 = vrot.slane %v20, %v59
  %v61 = vcombine.high %v60, %v60
  %v63 = vunpack.c.l.s4 1966171168
  %v64 = vunpack.c.0.s8 %v63
  %v65 = vlaneseq
  %v66 = vshrl.u32 %v65, 7
  %v67 = vsub.s32 %v64, %v66
  %v68 = vrot.slane %v60, %v67
  %v70 = vunpack.c.l.s4 1966171168
  %v71 = vunpack.c.0.s8 %v70
  %v72 = vlaneseq
  %v73 = vshrl.u32 %v72, 7
  %v74 = vsub.s32 %v71, %v73
  %v75 = vrot.slane %v61, %v74
  %v110 = vunpack.c.l.b16 %v21
  %v111 = vunpack.c.h.b16 %v21
  %v112 = vunpack.c.l.b16 %v22
  %v113 = vunpack.c.h.b16 %v22
  %v114 = vunpack.c.l.b16 %v23
  %v115 = vunpack.c.h.b16 %v23
  %v116 = vunpack.c.l.b16 %v24
  %v117 = vunpack.c.h.b16 %v24
  %v118 = vunpack.c.l.b16 %v25
  %v119 = vunpack.c.h.b16 %v25
  %v120 = vunpack.c.l.b16 %v26
  %v121 = vunpack.c.h.b16 %v26
  %v122 = vunpack.c.l.b16 %v27
  %v123 = vunpack.c.h.b16 %v27
  %v124 = vunpack.c.l.b16 %v28
  %v125 = vunpack.c.h.b16 %v28
  %v126 = vunpack.c.l.b16 %v29
  %v127 = vunpack.c.h.b16 %v29
  %v128 = vunpack.c.l.b16 %v30
  %v129 = vunpack.c.h.b16 %v30
  %v130 = vunpack.c.l.b16 %v31
  %v131 = vunpack.c.h.b16 %v31
  %v132 = vunpack.c.l.b16 %v32
  %v133 = vunpack.c.h.b16 %v32
  %v134 = vunpack.c.l.b16 %v33
  %v135 = vunpack.c.h.b16 %v33
  %v136 = vunpack.c.l.b16 %v34
  %v137 = vunpack.c.h.b16 %v34
  %v138 = vunpack.c.l.b16 %v35
  %v139 = vunpack.c.h.b16 %v35
  %v140 = vunpack.c.l.b16 %v36
  %v141 = vunpack.c.h.b16 %v36
  %v142 = vunpack.c.l.b16 %v37
  %v143 = vunpack.c.h.b16 %v37
  %v144 = vunpack.c.l.b16 %v38
  %v145 = vunpack.c.h.b16 %v38
  %v146 = vunpack.c.l.b16 %v39
  %v147 = vunpack.c.h.b16 %v39
  %v148 = vunpack.c.l.b16 %v40
  %v149 = vunpack.c.h.b16 %v40
  %v150 = vunpack.c.l.b16 %v41
  %v151 = vunpack.c.h.b16 %v41
  %v152 = vunpack.c.l.b16 %v42
  %v153 = vunpack.c.h.b16 %v42
  %v154 = vunpack.c.l.b16 %v43
  %v155 = vunpack.c.h.b16 %v43
  %v156 = vunpack.c.l.b16 %v44
  %v157 = vunpack.c.h.b16 %v44
  %v158 = vunpack.c.l.b16 %v45
  %v159 = vunpack.c.h.b16 %v45
  %v160 = vunpack.c.l.b16 %v46
  %v161 = vunpack.c.h.b16 %v46
  %v162 = vunpack.c.l.b16 %v47
  %v163 = vunpack.c.h.b16 %v47
  %v164 = vunpack.c.l.b16 %v48
  %v165 = vunpack.c.h.b16 %v48
  %v166 = vunpack.c.l.b16 %v49
  %v167 = vunpack.c.h.b16 %v49
  %v168 = vunpack.c.l.b16 %v50
  %v169 = vunpack.c.h.b16 %v50
  %v170 = vunpack.c.l.b16 %v51
  %v171 = vunpack.c.h.b16 %v51
  %v172 = vunpack.c.l.b16 %v52
  %v173 = vunpack.c.h.b16 %v52
  %v174 = vpack.c.b16 %v112, %v110
  %v175 = vpack.c.b16 %v113, %v111
  %v176 = vpack.c.b16 %v116, %v114
  %v177 = vpack.c.b16 %v117, %v115
  %v178 = vpack.c.b16 %v120, %v118
  %v179 = vpack.c.b16 %v121, %v119
  %v180 = vpack.c.b16 %v124, %v122
  %v181 = vpack.c.b16 %v125, %v123
  %v182 = vpack.c.b16 %v128, %v126
  %v183 = vpack.c.b16 %v129, %v127
  %v184 = vpack.c.b16 %v132, %v130
  %v185 = vpack.c.b16 %v133, %v131
  %v186 = vpack.c.b16 %v136, %v134
  %v187 = vpack.c.b16 %v137, %v135
  %v188 = vpack.c.b16 %v140, %v138
  %v189 = vpack.c.b16 %v141, %v139
  %v190 = vpack.c.b16 %v144, %v142
  %v191 = vpack.c.b16 %v145, %v143
  %v192 = vpack.c.b16 %v148, %v146
  %v193 = vpack.c.b16 %v149, %v147
  %v194 = vpack.c.b16 %v152, %v150
  %v195 = vpack.c.b16 %v153, %v151
  %v196 = vpack.c.b16 %v156, %v154
  %v197 = vpack.c.b16 %v157, %v155
  %v198 = vpack.c.b16 %v160, %v158
  %v199 = vpack.c.b16 %v161, %v159
  %v200 = vpack.c.b16 %v164, %v162
  %v201 = vpack.c.b16 %v165, %v163
  %v202 = vpack.c.b16 %v168, %v166
  %v203 = vpack.c.b16 %v169, %v167
  %v204 = vpack.c.b16 %v172, %v170
  %v205 = vpack.c.b16 %v173, %v171
  %238 = vmatprep.subr.bf16.mxu0 %v189
  %239 = vmatpush1.bf16.msra.mxu0 %v188
  %240 = vmatprep.subr.bf16.mxu0 %v187
  %241 = vmatpush1.bf16.msra.mxu0 %v186
  %242 = vmatprep.subr.bf16.mxu0 %v185
  %243 = vmatpush1.bf16.msra.mxu0 %v184
  %244 = vmatprep.subr.bf16.mxu0 %v183
  %245 = vmatpush1.bf16.msra.mxu0 %v182
  %246 = vmatprep.subr.bf16.mxu0 %v181
  %247 = vmatpush1.bf16.msra.mxu0 %v180
  %248 = vmatprep.subr.bf16.mxu0 %v179
  %249 = vmatpush1.bf16.msra.mxu0 %v178
  %250 = vmatprep.subr.bf16.mxu0 %v177
  %251 = vmatpush1.bf16.msra.mxu0 %v176
  %252 = vmatprep.subr.bf16.mxu0 %v175
  %253 = vmatpush1.bf16.msra.mxu0 %v174
  %254 = vmatprep.subr.bf16.mxu0 %v205
  %255 = vmatpush2.bf16.msra.mxu0 %v204
  %256 = vmatprep.subr.bf16.mxu0 %v203
  %257 = vmatpush2.bf16.msra.mxu0 %v202
  %258 = vmatprep.subr.bf16.mxu0 %v201
  %259 = vmatpush2.bf16.msra.mxu0 %v200
  %260 = vmatprep.subr.bf16.mxu0 %v199
  %261 = vmatpush2.bf16.msra.mxu0 %v198
  %262 = vmatprep.subr.bf16.mxu0 %v197
  %263 = vmatpush2.bf16.msra.mxu0 %v196
  %264 = vmatprep.subr.bf16.mxu0 %v195
  %265 = vmatpush2.bf16.msra.mxu0 %v194
  %266 = vmatprep.subr.bf16.mxu0 %v193
  %267 = vmatpush2.bf16.msra.mxu0 %v192
  %268 = vmatprep.subr.bf16.mxu0 %v191
  %269 = vmatpush2.bf16.msra.mxu0 %v190
  %270 = vmatprep.mubr.bf16.mxu0 %v75
  %271 = vmatmul.mubr.bf16.gmra.mxu0 %v68
  %v272 = vpop.f32.mrf.mxu0
  %v273 = vadd.f32 0.0, %v272
  %v274 = vpop.f32.mrf.mxu0
  %v275 = vadd.f32 0.0, %v274
  %v276 = vpop.f32.mrf.mxu0
  %v277 = vpop.f32.mrf.mxu0
  %278 = vdwg.mxu0
  %v281 = vcombine.low %v273, %v275
  %v283 = vunpack.c.l.s4 1983009808
  %v284 = vunpack.c.0.s8 %v283
  %v285 = vlaneseq
  %v286 = vshrl.u32 %v285, 7
  %v287 = vsub.s32 %v284, %v286
  %v288 = vrot.slane %v281, %v287
  %v290 = vadd.f32 %v19, %v288
  %291 = vst [vmem:[#allocation2] sm:$0xf] %v290
  // Predicated region
  $region18: #{classifier_forward.3} parent=0 // pred_check
    %p292 = pneg %p14
  $region19: #{classifier_forward.3} parent=0 // pred_check_branch
    %294 = sbr.rel (%p292) target = $region21
  $region20: #{classifier_forward.3} parent=0 // pred_region
    %v295 = vld [vmem:[#allocation2] sm:$0xf]
    %v296 = vld [vmem:[%s2] sm:$0x3]
    %v298 = vlaneseq
    %v299 = vshrl.u32 %v298, 7
    %v300 = vsub.s32 0, %v299
    %v301 = vrot.slane %v296, %v300
    %v302 = vlaneseq
    %v303 = vshrl.u32 %v302, 7
    %v304 = vsub.s32 1, %v303
    %v305 = vrot.slane %v296, %v304
    %v306 = vcombine.low %v301, %v305
    %v308 = vunpack.c.l.s4 1983009808
    %v309 = vunpack.c.0.s8 %v308
    %v310 = vlaneseq
    %v311 = vshrl.u32 %v310, 7
    %v312 = vsub.s32 %v309, %v311
    %v313 = vrot.slane %v306, %v312
    %v315 = vadd.f32 %v295, %v313
    %v316 = vmax.f32 %v315, 0.0
    %v319 = vunpack.c.l.s4 1983009808
    %v320 = vunpack.c.0.s8 %v319
    %v321 = vlaneseq
    %v322 = vshrl.u32 %v321, 7
    %v323 = vsub.s32 %v320, %v322
    %v324 = vrot.slane %v316, %v323
    %v325 = vcombine.high %v324, %v324
    %v328 = vpack.c.bf16 %v324, %v324
    %v329 = vpack.c.bf16 %v325, %v325
    %v332 = vcombine.low %v328, %v329
    %v334 = vunpack.c.l.s4 1966171168
    %v335 = vunpack.c.0.s8 %v334
    %v336 = vlaneseq
    %v337 = vshrl.u32 %v336, 7
    %v338 = vsub.s32 %v335, %v337
    %v339 = vrot.slane %v332, %v338
    %v341 = vunpack.c.l.s4 1966171168
    %v342 = vunpack.c.0.s8 %v341
    %v343 = vlaneseq
    %v344 = vshrl.u32 %v343, 7
    %v345 = vsub.s32 %v342, %v344
    %v346 = vrot.slane %v339, %v345
    %348 = vst [vmem:[%s3] sm:$0x3] %v346
  $region21: #{classifier_forward.3} parent=0 // pred_fallthru
    _
  // Predicated region
  $region22: #{classifier_forward.3} parent=0 // pred_check
    _
  $region23: #{classifier_forward.3} parent=0 // pred_check_branch
    %350 = sbr.rel (0) target = $region25
  $region24: #{classifier_forward.3} parent=0 // pred_region
    _
  $region25: #{classifier_forward.3} parent=0 // pred_fallthru
    _
  // Predicated region
  $region26: #{classifier_forward.3} parent=0 // pred_check
    _
  $region27: #{classifier_forward.3} parent=0 // pred_check_branch
    %352 = sbr.rel (0) target = $region29
  $region28: #{classifier_forward.3} parent=0 // pred_region
    _
  $region29: #{classifier_forward.3} parent=0 // pred_fallthru
    _

// kernel: classifier_forward.2
$region0: #{classifier_forward.2}
  #allocation0 [shape = 'u32[]', space=smem, size = 0x4, offset = 0x4, fixed_abs, tag = 'smem constant byte address 0x4 - core index']
  #allocation1 [shape = 'u32[144,128]{1,0:T(1,128)}', space=vmem, size = 0x12000, scoped, tag = 'internal scratch']
  #allocation2 [shape = 'f32[2,256]{1,0:T(2,128)}', space=vmem, size = 0x800, scoped, tag = 'scratch operand']
  %s0 = inlined_call_operand.vmem [shape: bf16[2,512], index: 0, kind: input, shape index: {}]
  %s1 = inlined_call_operand.hbm [shape: bf16[1,512,256], index: 1, kind: input, shape index: {}]
  %s2 = inlined_call_operand.vmem [shape: f32[1,256], index: 2, kind: input, shape index: {}]
  %s3 = inlined_call_operand.vmem [shape: bf16[2,256], index: 3, kind: output, shape index: {}]
  %s4 = sld [smem:[#allocation0]]
  $region34: #{classifier_forward.2} parent=0
    _
  %s6 = ssub.s32 1, %s4
  %s7 = scalar_select 0, %s6, %s4
  $region1: #{classifier_forward.2} parent=0
    #allocation3 [shape = 'u8[262144]{0}', space=vmem, size = 0x40000, scoped, tag = 'input window, operand 1, single buffered']
    #allocation4 [shape = 's32[1]{0}', space=sflag, size = 0x4, scoped, tag = 'scoped memory for classifier_forward.2']
    %8 = vsyncpa [#allocation4], 0
    // Predicated region
    $region2: #{classifier_forward.2} parent=1 // pred_check
      _
    $region3: #{classifier_forward.2} parent=1 // pred_check_branch
      %10 = sbr.rel (0) target = $region5
    $region4: #{classifier_forward.2} parent=1 // pred_region
      _
    $region5: #{classifier_forward.2} parent=1 // pred_fallthru
      _
    // Predicated region
    $region6: #{classifier_forward.2} parent=1 // pred_check
      _
    $region7: #{classifier_forward.2} parent=1 // pred_check_branch
      %12 = sbr.rel (0) target = $region9
    $region8: #{classifier_forward.2} parent=1 // pred_region
      %s14 = ssub.s32 8192, 8192
      %15 = vsyncadd [#allocation4], %s14
      %s16 = sshll.u32 [#allocation3], 4
      %s17 = int_to_ptr.vmem [resolvable:$true] %s16
      %22 = dma.hbm_to_vmem [thread:$0]  %s1, 8192, %s17, [#allocation4], 128, 128, 8
    $region9: #{classifier_forward.2} parent=1 // pred_fallthru
      _
    // Predicated region
    $region10: #{classifier_forward.2} parent=1 // pred_check
      _
    $region11: #{classifier_forward.2} parent=1 // pred_check_branch
      %24 = sbr.rel (0) target = $region13
    $region12: #{classifier_forward.2} parent=1 // pred_region
      _
    $region13: #{classifier_forward.2} parent=1 // pred_fallthru
      _
    // Predicated region
    $region14: #{classifier_forward.2} parent=1 // pred_check
      _
    $region15: #{classifier_forward.2} parent=1 // pred_check_branch
      %26 = sbr.rel (0) target = $region17
    $region16: #{classifier_forward.2} parent=1 // pred_region
      %27 = dma.done [#allocation4], 8192
    $region17: #{classifier_forward.2} parent=1 // pred_fallthru
      _
    %p28 = scmp.eq.s32.totalorder 0, 0
    // Predicated region
    $region18: #{classifier_forward.2} parent=1 // pred_check
      %p29 = pneg %p28
    $region19: #{classifier_forward.2} parent=1 // pred_check_branch
      %31 = sbr.rel (%p29) target = $region21
    $region20: #{classifier_forward.2} parent=1 // pred_region
      %32 = vst [vmem:[#allocation2] sm:$0xf] 0.0
    $region21: #{classifier_forward.2} parent=1 // pred_fallthru
      _
    %v33 = vld [vmem:[#allocation2] sm:$0xf]
    %v34 = vld [vmem:[%s0] sm:$0xf]
    %v35 = vld [vmem:[#allocation3] sm:$0xff]
    %v36 = vld [vmem:[#allocation3 + $0x8] sm:$0xff]
    %v37 = vld [vmem:[#allocation3 + $0x10] sm:$0xff]
    %v38 = vld [vmem:[#allocation3 + $0x18] sm:$0xff]
    %v39 = vld [vmem:[#allocation3 + $0x20] sm:$0xff]
    %v40 = vld [vmem:[#allocation3 + $0x28] sm:$0xff]
    %v41 = vld [vmem:[#allocation3 + $0x30] sm:$0xff]
    %v42 = vld [vmem:[#allocation3 + $0x38] sm:$0xff]
    %v43 = vld [vmem:[#allocation3 + $0x40] sm:$0xff]
    %v44 = vld [vmem:[#allocation3 + $0x48] sm:$0xff]
    %v45 = vld [vmem:[#allocation3 + $0x50] sm:$0xff]
    %v46 = vld [vmem:[#allocation3 + $0x58] sm:$0xff]
    %v47 = vld [vmem:[#allocation3 + $0x60] sm:$0xff]
    %v48 = vld [vmem:[#allocation3 + $0x68] sm:$0xff]
    %v49 = vld [vmem:[#allocation3 + $0x70] sm:$0xff]
    %v50 = vld [vmem:[#allocation3 + $0x78] sm:$0xff]
    %v51 = vld [vmem:[#allocation3 + $0x80] sm:$0xff]
    %v52 = vld [vmem:[#allocation3 + $0x88] sm:$0xff]
    %v53 = vld [vmem:[#allocation3 + $0x90] sm:$0xff]
    %v54 = vld [vmem:[#allocation3 + $0x98] sm:$0xff]
    %v55 = vld [vmem:[#allocation3 + $0xa0] sm:$0xff]
    %v56 = vld [vmem:[#allocation3 + $0xa8] sm:$0xff]
    %v57 = vld [vmem:[#allocation3 + $0xb0] sm:$0xff]
    %v58 = vld [vmem:[#allocation3 + $0xb8] sm:$0xff]
    %v59 = vld [vmem:[#allocation3 + $0xc0] sm:$0xff]
    %v60 = vld [vmem:[#allocation3 + $0xc8] sm:$0xff]
    %v61 = vld [vmem:[#allocation3 + $0xd0] sm:$0xff]
    %v62 = vld [vmem:[#allocation3 + $0xd8] sm:$0xff]
    %v63 = vld [vmem:[#allocation3 + $0xe0] sm:$0xff]
    %v64 = vld [vmem:[#allocation3 + $0xe8] sm:$0xff]
    %v65 = vld [vmem:[#allocation3 + $0xf0] sm:$0xff]
    %v66 = vld [vmem:[#allocation3 + $0xf8] sm:$0xff]
    %v67 = vld [vmem:[#allocation3 + $0x100] sm:$0xff]
    %v68 = vld [vmem:[#allocation3 + $0x108] sm:$0xff]
    %v69 = vld [vmem:[#allocation3 + $0x110] sm:$0xff]
    %v70 = vld [vmem:[#allocation3 + $0x118] sm:$0xff]
    %v71 = vld [vmem:[#allocation3 + $0x120] sm:$0xff]
    %v72 = vld [vmem:[#allocation3 + $0x128] sm:$0xff]
    %v73 = vld [vmem:[#allocation3 + $0x130] sm:$0xff]
    %v74 = vld [vmem:[#allocation3 + $0x138] sm:$0xff]
    %v75 = vld [vmem:[#allocation3 + $0x140] sm:$0xff]
    %v76 = vld [vmem:[#allocation3 + $0x148] sm:$0xff]
    %v77 = vld [vmem:[#allocation3 + $0x150] sm:$0xff]
    %v78 = vld [vmem:[#allocation3 + $0x158] sm:$0xff]
    %v79 = vld [vmem:[#allocation3 + $0x160] sm:$0xff]
    %v80 = vld [vmem:[#allocation3 + $0x168] sm:$0xff]
    %v81 = vld [vmem:[#allocation3 + $0x170] sm:$0xff]
    %v82 = vld [vmem:[#allocation3 + $0x178] sm:$0xff]
    %v83 = vld [vmem:[#allocation3 + $0x180] sm:$0xff]
    %v84 = vld [vmem:[#allocation3 + $0x188] sm:$0xff]
    %v85 = vld [vmem:[#allocation3 + $0x190] sm:$0xff]
    %v86 = vld [vmem:[#allocation3 + $0x198] sm:$0xff]
    %v87 = vld [vmem:[#allocation3 + $0x1a0] sm:$0xff]
    %v88 = vld [vmem:[#allocation3 + $0x1a8] sm:$0xff]
    %v89 = vld [vmem:[#allocation3 + $0x1b0] sm:$0xff]
    %v90 = vld [vmem:[#allocation3 + $0x1b8] sm:$0xff]
    %v91 = vld [vmem:[#allocation3 + $0x1c0] sm:$0xff]
    %v92 = vld [vmem:[#allocation3 + $0x1c8] sm:$0xff]
    %v93 = vld [vmem:[#allocation3 + $0x1d0] sm:$0xff]
    %v94 = vld [vmem:[#allocation3 + $0x1d8] sm:$0xff]
    %v95 = vld [vmem:[#allocation3 + $0x1e0] sm:$0xff]
    %v96 = vld [vmem:[#allocation3 + $0x1e8] sm:$0xff]
    %v97 = vld [vmem:[#allocation3 + $0x1f0] sm:$0xff]
    %v98 = vld [vmem:[#allocation3 + $0x1f8] sm:$0xff]
    %v101 = vunpack.c.l.s4 1966171168
    %v102 = vunpack.c.0.s8 %v101
    %v103 = vlaneseq
    %v104 = vshrl.u32 %v103, 7
    %v105 = vsub.s32 %v102, %v104
    %v106 = vrot.slane %v34, %v105
    %v107 = vcombine.high %v106, %v106
    %v109 = vunpack.c.l.s4 1966171168
    %v110 = vunpack.c.0.s8 %v109
    %v111 = vlaneseq
    %v112 = vshrl.u32 %v111, 7
    %v113 = vsub.s32 %v110, %v112
    %v114 = vrot.slane %v106, %v113
    %v116 = vunpack.c.l.s4 1966171168
    %v117 = vunpack.c.0.s8 %v116
    %v118 = vlaneseq
    %v119 = vshrl.u32 %v118, 7
    %v120 = vsub.s32 %v117, %v119
    %v121 = vrot.slane %v107, %v120
    %v122 = vcombine.high %v114, %v114
    %v123 = vcombine.high %v121, %v121
    %v192 = vunpack.c.l.b16 %v35
    %v193 = vunpack.c.h.b16 %v35
    %v194 = vunpack.c.l.b16 %v36
    %v195 = vunpack.c.h.b16 %v36
    %v196 = vunpack.c.l.b16 %v37
    %v197 = vunpack.c.h.b16 %v37
    %v198 = vunpack.c.l.b16 %v38
    %v199 = vunpack.c.h.b16 %v38
    %v200 = vunpack.c.l.b16 %v39
    %v201 = vunpack.c.h.b16 %v39
    %v202 = vunpack.c.l.b16 %v40
    %v203 = vunpack.c.h.b16 %v40
    %v204 = vunpack.c.l.b16 %v41
    %v205 = vunpack.c.h.b16 %v41
    %v206 = vunpack.c.l.b16 %v42
    %v207 = vunpack.c.h.b16 %v42
    %v208 = vunpack.c.l.b16 %v43
    %v209 = vunpack.c.h.b16 %v43
    %v210 = vunpack.c.l.b16 %v44
    %v211 = vunpack.c.h.b16 %v44
    %v212 = vunpack.c.l.b16 %v45
    %v213 = vunpack.c.h.b16 %v45
    %v214 = vunpack.c.l.b16 %v46
    %v215 = vunpack.c.h.b16 %v46
    %v216 = vunpack.c.l.b16 %v47
    %v217 = vunpack.c.h.b16 %v47
    %v218 = vunpack.c.l.b16 %v48
    %v219 = vunpack.c.h.b16 %v48
    %v220 = vunpack.c.l.b16 %v49
    %v221 = vunpack.c.h.b16 %v49
    %v222 = vunpack.c.l.b16 %v50
    %v223 = vunpack.c.h.b16 %v50
    %v224 = vunpack.c.l.b16 %v51
    %v225 = vunpack.c.h.b16 %v51
    %v226 = vunpack.c.l.b16 %v52
    %v227 = vunpack.c.h.b16 %v52
    %v228 = vunpack.c.l.b16 %v53
    %v229 = vunpack.c.h.b16 %v53
    %v230 = vunpack.c.l.b16 %v54
    %v231 = vunpack.c.h.b16 %v54
    %v232 = vunpack.c.l.b16 %v55
    %v233 = vunpack.c.h.b16 %v55
    %v234 = vunpack.c.l.b16 %v56
    %v235 = vunpack.c.h.b16 %v56
    %v236 = vunpack.c.l.b16 %v57
    %v237 = vunpack.c.h.b16 %v57
    %v238 = vunpack.c.l.b16 %v58
    %v239 = vunpack.c.h.b16 %v58
    %v240 = vunpack.c.l.b16 %v59
    %v241 = vunpack.c.h.b16 %v59
    %v242 = vunpack.c.l.b16 %v60
    %v243 = vunpack.c.h.b16 %v60
    %v244 = vunpack.c.l.b16 %v61
    %v245 = vunpack.c.h.b16 %v61
    %v246 = vunpack.c.l.b16 %v62
    %v247 = vunpack.c.h.b16 %v62
    %v248 = vunpack.c.l.b16 %v63
    %v249 = vunpack.c.h.b16 %v63
    %v250 = vunpack.c.l.b16 %v64
    %v251 = vunpack.c.h.b16 %v64
    %v252 = vunpack.c.l.b16 %v65
    %v253 = vunpack.c.h.b16 %v65
    %v254 = vunpack.c.l.b16 %v66
    %v255 = vunpack.c.h.b16 %v66
    %v256 = vunpack.c.l.b16 %v67
    %v257 = vunpack.c.h.b16 %v67
    %v258 = vunpack.c.l.b16 %v68
    %v259 = vunpack.c.h.b16 %v68
    %v260 = vunpack.c.l.b16 %v69
    %v261 = vunpack.c.h.b16 %v69
    %v262 = vunpack.c.l.b16 %v70
    %v263 = vunpack.c.h.b16 %v70
    %v264 = vunpack.c.l.b16 %v71
    %v265 = vunpack.c.h.b16 %v71
    %v266 = vunpack.c.l.b16 %v72
    %v267 = vunpack.c.h.b16 %v72
    %v268 = vunpack.c.l.b16 %v73
    %v269 = vunpack.c.h.b16 %v73
    %v270 = vunpack.c.l.b16 %v74
    %v271 = vunpack.c.h.b16 %v74
    %v272 = vunpack.c.l.b16 %v75
    %v273 = vunpack.c.h.b16 %v75
    %v274 = vunpack.c.l.b16 %v76
    %v275 = vunpack.c.h.b16 %v76
    %v276 = vunpack.c.l.b16 %v77
    %v277 = vunpack.c.h.b16 %v77
    %v278 = vunpack.c.l.b16 %v78
    %v279 = vunpack.c.h.b16 %v78
    %v280 = vunpack.c.l.b16 %v79
    %v281 = vunpack.c.h.b16 %v79
    %v282 = vunpack.c.l.b16 %v80
    %v283 = vunpack.c.h.b16 %v80
    %v284 = vunpack.c.l.b16 %v81
    %v285 = vunpack.c.h.b16 %v81
    %v286 = vunpack.c.l.b16 %v82
    %v287 = vunpack.c.h.b16 %v82
    %v288 = vunpack.c.l.b16 %v83
    %v289 = vunpack.c.h.b16 %v83
    %v290 = vunpack.c.l.b16 %v84
    %v291 = vunpack.c.h.b16 %v84
    %v292 = vunpack.c.l.b16 %v85
    %v293 = vunpack.c.h.b16 %v85
    %v294 = vunpack.c.l.b16 %v86
    %v295 = vunpack.c.h.b16 %v86
    %v296 = vunpack.c.l.b16 %v87
    %v297 = vunpack.c.h.b16 %v87
    %v298 = vunpack.c.l.b16 %v88
    %v299 = vunpack.c.h.b16 %v88
    %v300 = vunpack.c.l.b16 %v89
    %v301 = vunpack.c.h.b16 %v89
    %v302 = vunpack.c.l.b16 %v90
    %v303 = vunpack.c.h.b16 %v90
    %v304 = vunpack.c.l.b16 %v91
    %v305 = vunpack.c.h.b16 %v91
    %v306 = vunpack.c.l.b16 %v92
    %v307 = vunpack.c.h.b16 %v92
    %v308 = vunpack.c.l.b16 %v93
    %v309 = vunpack.c.h.b16 %v93
    %v310 = vunpack.c.l.b16 %v94
    %v311 = vunpack.c.h.b16 %v94
    %v312 = vunpack.c.l.b16 %v95
    %v313 = vunpack.c.h.b16 %v95
    %v314 = vunpack.c.l.b16 %v96
    %v315 = vunpack.c.h.b16 %v96
    %v316 = vunpack.c.l.b16 %v97
    %v317 = vunpack.c.h.b16 %v97
    %v318 = vunpack.c.l.b16 %v98
    %v319 = vunpack.c.h.b16 %v98
    %v320 = vpack.c.b16 %v194, %v192
    %v321 = vpack.c.b16 %v195, %v193
    %v322 = vpack.c.b16 %v198, %v196
    %v323 = vpack.c.b16 %v199, %v197
    %v324 = vpack.c.b16 %v202, %v200
    %v325 = vpack.c.b16 %v203, %v201
    %v326 = vpack.c.b16 %v206, %v204
    %v327 = vpack.c.b16 %v207, %v205
    %v328 = vpack.c.b16 %v210, %v208
    %v329 = vpack.c.b16 %v211, %v209
    %v330 = vpack.c.b16 %v214, %v212
    %v331 = vpack.c.b16 %v215, %v213
    %v332 = vpack.c.b16 %v218, %v216
    %v333 = vpack.c.b16 %v219, %v217
    %v334 = vpack.c.b16 %v222, %v220
    %v335 = vpack.c.b16 %v223, %v221
    %v336 = vpack.c.b16 %v226, %v224
    %v337 = vpack.c.b16 %v227, %v225
    %v338 = vpack.c.b16 %v230, %v228
    %v339 = vpack.c.b16 %v231, %v229
    %v340 = vpack.c.b16 %v234, %v232
    %v341 = vpack.c.b16 %v235, %v233
    %v342 = vpack.c.b16 %v238, %v236
    %v343 = vpack.c.b16 %v239, %v237
    %v344 = vpack.c.b16 %v242, %v240
    %v345 = vpack.c.b16 %v243, %v241
    %v346 = vpack.c.b16 %v246, %v244
    %v347 = vpack.c.b16 %v247, %v245
    %v348 = vpack.c.b16 %v250, %v248
    %v349 = vpack.c.b16 %v251, %v249
    %v350 = vpack.c.b16 %v254, %v252
    %v351 = vpack.c.b16 %v255, %v253
    %v352 = vpack.c.b16 %v258, %v256
    %v353 = vpack.c.b16 %v259, %v257
    %v354 = vpack.c.b16 %v262, %v260
    %v355 = vpack.c.b16 %v263, %v261
    %v356 = vpack.c.b16 %v266, %v264
    %v357 = vpack.c.b16 %v267, %v265
    %v358 = vpack.c.b16 %v270, %v268
    %v359 = vpack.c.b16 %v271, %v269
    %v360 = vpack.c.b16 %v274, %v272
    %v361 = vpack.c.b16 %v275, %v273
    %v362 = vpack.c.b16 %v278, %v276
    %v363 = vpack.c.b16 %v279, %v277
    %v364 = vpack.c.b16 %v282, %v280
    %v365 = vpack.c.b16 %v283, %v281
    %v366 = vpack.c.b16 %v286, %v284
    %v367 = vpack.c.b16 %v287, %v285
    %v368 = vpack.c.b16 %v290, %v288
    %v369 = vpack.c.b16 %v291, %v289
    %v370 = vpack.c.b16 %v294, %v292
    %v371 = vpack.c.b16 %v295, %v293
    %v372 = vpack.c.b16 %v298, %v296
    %v373 = vpack.c.b16 %v299, %v297
    %v374 = vpack.c.b16 %v302, %v300
    %v375 = vpack.c.b16 %v303, %v301
    %v376 = vpack.c.b16 %v306, %v304
    %v377 = vpack.c.b16 %v307, %v305
    %v378 = vpack.c.b16 %v310, %v308
    %v379 = vpack.c.b16 %v311, %v309
    %v380 = vpack.c.b16 %v314, %v312
    %v381 = vpack.c.b16 %v315, %v313
    %v382 = vpack.c.b16 %v318, %v316
    %v383 = vpack.c.b16 %v319, %v317
    %448 = vmatprep.subr.bf16.mxu0 %v335
    %449 = vmatpush1.bf16.msra.mxu0 %v334
    %450 = vmatprep.subr.bf16.mxu0 %v333
    %451 = vmatpush1.bf16.msra.mxu0 %v332
    %452 = vmatprep.subr.bf16.mxu0 %v331
    %453 = vmatpush1.bf16.msra.mxu0 %v330
    %454 = vmatprep.subr.bf16.mxu0 %v329
    %455 = vmatpush1.bf16.msra.mxu0 %v328
    %456 = vmatprep.subr.bf16.mxu0 %v327
    %457 = vmatpush1.bf16.msra.mxu0 %v326
    %458 = vmatprep.subr.bf16.mxu0 %v325
    %459 = vmatpush1.bf16.msra.mxu0 %v324
    %460 = vmatprep.subr.bf16.mxu0 %v323
    %461 = vmatpush1.bf16.msra.mxu0 %v322
    %462 = vmatprep.subr.bf16.mxu0 %v321
    %463 = vmatpush1.bf16.msra.mxu0 %v320
    %464 = vmatprep.subr.bf16.mxu0 %v351
    %465 = vmatpush2.bf16.msra.mxu0 %v350
    %466 = vmatprep.subr.bf16.mxu0 %v349
    %467 = vmatpush2.bf16.msra.mxu0 %v348
    %468 = vmatprep.subr.bf16.mxu0 %v347
    %469 = vmatpush2.bf16.msra.mxu0 %v346
    %470 = vmatprep.subr.bf16.mxu0 %v345
    %471 = vmatpush2.bf16.msra.mxu0 %v344
    %472 = vmatprep.subr.bf16.mxu0 %v343
    %473 = vmatpush2.bf16.msra.mxu0 %v342
    %474 = vmatprep.subr.bf16.mxu0 %v341
    %475 = vmatpush2.bf16.msra.mxu0 %v340
    %476 = vmatprep.subr.bf16.mxu0 %v339
    %477 = vmatpush2.bf16.msra.mxu0 %v338
    %478 = vmatprep.subr.bf16.mxu0 %v337
    %479 = vmatpush2.bf16.msra.mxu0 %v336
    %480 = vmatprep.mubr.bf16.mxu0 %v121
    %481 = vmatmul.mubr.bf16.gmra.mxu0 %v114
    %v482 = vpop.f32.mrf.mxu0
    %v483 = vadd.f32 0.0, %v482
    %v484 = vpop.f32.mrf.mxu0
    %v485 = vadd.f32 0.0, %v484
    %v486 = vpop.f32.mrf.mxu0
    %v487 = vpop.f32.mrf.mxu0
    %488 = vdwg.mxu0
    %489 = vmatprep.subr.bf16.mxu0 %v367
    %490 = vmatpush1.bf16.msra.mxu0 %v366
    %491 = vmatprep.subr.bf16.mxu0 %v365
    %492 = vmatpush1.bf16.msra.mxu0 %v364
    %493 = vmatprep.subr.bf16.mxu0 %v363
    %494 = vmatpush1.bf16.msra.mxu0 %v362
    %495 = vmatprep.subr.bf16.mxu0 %v361
    %496 = vmatpush1.bf16.msra.mxu0 %v360
    %497 = vmatprep.subr.bf16.mxu0 %v359
    %498 = vmatpush1.bf16.msra.mxu0 %v358
    %499 = vmatprep.subr.bf16.mxu0 %v357
    %500 = vmatpush1.bf16.msra.mxu0 %v356
    %501 = vmatprep.subr.bf16.mxu0 %v355
    %502 = vmatpush1.bf16.msra.mxu0 %v354
    %503 = vmatprep.subr.bf16.mxu0 %v353
    %504 = vmatpush1.bf16.msra.mxu0 %v352
    %505 = vmatprep.subr.bf16.mxu0 %v383
    %506 = vmatpush2.bf16.msra.mxu0 %v382
    %507 = vmatprep.subr.bf16.mxu0 %v381
    %508 = vmatpush2.bf16.msra.mxu0 %v380
    %509 = vmatprep.subr.bf16.mxu0 %v379
    %510 = vmatpush2.bf16.msra.mxu0 %v378
    %511 = vmatprep.subr.bf16.mxu0 %v377
    %512 = vmatpush2.bf16.msra.mxu0 %v376
    %513 = vmatprep.subr.bf16.mxu0 %v375
    %514 = vmatpush2.bf16.msra.mxu0 %v374
    %515 = vmatprep.subr.bf16.mxu0 %v373
    %516 = vmatpush2.bf16.msra.mxu0 %v372
    %517 = vmatprep.subr.bf16.mxu0 %v371
    %518 = vmatpush2.bf16.msra.mxu0 %v370
    %519 = vmatprep.subr.bf16.mxu0 %v369
    %520 = vmatpush2.bf16.msra.mxu0 %v368
    %521 = vmatprep.mubr.bf16.mxu0 %v123
    %522 = vmatmul.mubr.bf16.gmra.mxu0 %v122
    %v523 = vpop.f32.mrf.mxu0
    %v524 = vadd.f32 %v483, %v523
    %v525 = vpop.f32.mrf.mxu0
    %v526 = vadd.f32 %v485, %v525
    %v527 = vpop.f32.mrf.mxu0
    %v528 = vpop.f32.mrf.mxu0
    %529 = vdwg.mxu0
    %v532 = vcombine.low %v524, %v526
    %v534 = vunpack.c.l.s4 1983009808
    %v535 = vunpack.c.0.s8 %v534
    %v536 = vlaneseq
    %v537 = vshrl.u32 %v536, 7
    %v538 = vsub.s32 %v535, %v537
    %v539 = vrot.slane %v532, %v538
    %v541 = vadd.f32 %v33, %v539
    %542 = vst [vmem:[#allocation2] sm:$0xf] %v541
    // Predicated region
    $region22: #{classifier_forward.2} parent=1 // pred_check
      %p543 = pneg %p28
    $region23: #{classifier_forward.2} parent=1 // pred_check_branch
      %545 = sbr.rel (%p543) target = $region25
    $region24: #{classifier_forward.2} parent=1 // pred_region
      %v546 = vld [vmem:[#allocation2] sm:$0xf]
      %v547 = vld [vmem:[%s2] sm:$0x3]
      %v549 = vlaneseq
      %v550 = vshrl.u32 %v549, 7
      %v551 = vsub.s32 0, %v550
      %v552 = vrot.slane %v547, %v551
      %v553 = vlaneseq
      %v554 = vshrl.u32 %v553, 7
      %v555 = vsub.s32 1, %v554
      %v556 = vrot.slane %v547, %v555
      %v557 = vcombine.low %v552, %v556
      %v559 = vunpack.c.l.s4 1983009808
      %v560 = vunpack.c.0.s8 %v559
      %v561 = vlaneseq
      %v562 = vshrl.u32 %v561, 7
      %v563 = vsub.s32 %v560, %v562
      %v564 = vrot.slane %v557, %v563
      %v566 = vadd.f32 %v546, %v564
      %v567 = vmax.f32 %v566, 0.0
      %v570 = vunpack.c.l.s4 1983009808
      %v571 = vunpack.c.0.s8 %v570
      %v572 = vlaneseq
      %v573 = vshrl.u32 %v572, 7
      %v574 = vsub.s32 %v571, %v573
      %v575 = vrot.slane %v567, %v574
      %v576 = vcombine.high %v575, %v575
      %v579 = vpack.c.bf16 %v575, %v575
      %v580 = vpack.c.bf16 %v576, %v576
      %v583 = vcombine.low %v579, %v580
      %v585 = vunpack.c.l.s4 1966171168
      %v586 = vunpack.c.0.s8 %v585
      %v587 = vlaneseq
      %v588 = vshrl.u32 %v587, 7
      %v589 = vsub.s32 %v586, %v588
      %v590 = vrot.slane %v583, %v589
      %v592 = vunpack.c.l.s4 1966171168
      %v593 = vunpack.c.0.s8 %v592
      %v594 = vlaneseq
      %v595 = vshrl.u32 %v594, 7
      %v596 = vsub.s32 %v593, %v595
      %v597 = vrot.slane %v590, %v596
      %599 = vst [vmem:[%s3] sm:$0x3] %v597
    $region25: #{classifier_forward.2} parent=1 // pred_fallthru
      _
    // Predicated region
    $region26: #{classifier_forward.2} parent=1 // pred_check
      _
    $region27: #{classifier_forward.2} parent=1 // pred_check_branch
      %601 = sbr.rel (0) target = $region29
    $region28: #{classifier_forward.2} parent=1 // pred_region
      _
    $region29: #{classifier_forward.2} parent=1 // pred_fallthru
      _
    // Predicated region
    $region30: #{classifier_forward.2} parent=1 // pred_check
      _
    $region31: #{classifier_forward.2} parent=1 // pred_check_branch
      %603 = sbr.rel (0) target = $region33
    $region32: #{classifier_forward.2} parent=1 // pred_region
      _
    $region33: #{classifier_forward.2} parent=1 // pred_fallthru
      _
    %604 = vsyncpa [#allocation4], 1

</llo_original>
